<compile_context>
chip_gen: v6e
topology: v6e:2x2x1
jax: 0.10.0
libtpu: 0.0.40
codegen_flags: <defaults>
</compile_context>

<pallas_src>
import functools

import jax
import jax.numpy as jnp
from jax.experimental import pallas as pl
from jax.experimental.pallas import tpu as pltpu


def _round_up(x: int, m: int) -> int:
    return (x + m - 1) // m * m


def _critic_kernel(x_ref, w_ref, vec_ref, out_ref):
    """Fused 4-layer critic MLP on one batch tile.

    x_ref   : (TB, F)    zero-padded state tile (bf16)
    w_ref   : (3, F, F)  zero-padded W1/W2/W3 in (in, out) layout, bf16,
                         VMEM-resident (constant index_map, single-buffered)
    vec_ref : (8, F)     f32; rows 0..2 = b1,b2,b3 ; row 3 = value-head weights
                         as a row ; row 4 = value bias replicated across lanes
    out_ref : (TB, 128)  value broadcast across lanes (caller keeps lane 0)
    """
    h = x_ref[...]                                   # bf16 MXU operand

    # Three hidden layers: bf16 MXU operands, f32 accumulation, f32 bias+ReLU
    # on the VPU, cast back to bf16 only as the next layer's MXU operand.
    hf = None
    for l in range(3):                               # statically unrolled
        acc = jnp.dot(h, w_ref[l],                   # (TB, F) f32 accumulate
                      preferred_element_type=jnp.float32)
        hf = jnp.maximum(acc + vec_ref[l:l + 1, :], 0.0)   # f32
        h = hf.astype(jnp.bfloat16)

    # Value head (n_outputs == 1): VPU multiply + XLU cross-lane reduce instead
    # of a 1-lane MXU matmul. Uses the f32 activations for full precision.
    wv_row = vec_ref[3:4, :]                         # (1, F)   f32
    bv_row = vec_ref[4:5, :128]                      # (1, 128) bias replicated
    v = jnp.sum(hf * wv_row, axis=-1, keepdims=True)  # (TB, 1) f32
    # Lane-dense (unmasked) store: every lane holds the same value.
    # TODO(synk): for very large B, a lane-major (XLU-transposed) output would
    # cut writeback ~16x; negligible at small batches so not done here.
    out_ref[...] = v + bv_row


def pack_critic_params(params):
    """Pack the 8 parameter arrays into two (8,128)-aligned VMEM slabs."""
    w1, b1 = params["w1"], params["b1"]
    w2, b2 = params["w2"], params["b2"]
    w3, b3 = params["w3"], params["b3"]
    wv, bv = params["wv"], params["bv"]
    # TODO(synk): value head fast path assumes n_outputs == 1 (standard critic);
    # a multi-output head would need the 4th matmul kept on the MXU.
    assert wv.shape[1] == 1, "packed critic kernel assumes n_outputs == 1"

    dims = (w1.shape[0], w1.shape[1], w2.shape[1], w3.shape[1])
    # TODO(synk): if hidden dims ever differ a lot per layer, pad each layer's
    # K/N to its own multiple of 128 instead of square-padding to max(dims).
    F = _round_up(max(dims), 128)

    # Weight slab in bf16: halves HBM->VMEM traffic and avoids re-casting the
    # resident weights on every grid step inside the kernel.
    w_slab = jnp.zeros((3, F, F), jnp.bfloat16)
    for l, w in enumerate((w1, w2, w3)):
        w_slab = w_slab.at[l, :w.shape[0], :w.shape[1]].set(
            w.astype(jnp.bfloat16))

    # Bias / value-head slab stays f32 (tiny, and keeps bias add full precision).
    vec_slab = jnp.zeros((8, F), jnp.float32)
    vec_slab = vec_slab.at[0, :b1.shape[-1]].set(b1.reshape(-1).astype(jnp.float32))
    vec_slab = vec_slab.at[1, :b2.shape[-1]].set(b2.reshape(-1).astype(jnp.float32))
    vec_slab = vec_slab.at[2, :b3.shape[-1]].set(b3.reshape(-1).astype(jnp.float32))
    vec_slab = vec_slab.at[3, :wv.shape[0]].set(wv[:, 0].astype(jnp.float32))
    vec_slab = vec_slab.at[4, :].set(bv.reshape(-1)[0].astype(jnp.float32))
    return w_slab, vec_slab


@functools.partial(jax.jit, static_argnames=("n_outputs",))
def critic_forward(state, w_slab, vec_slab, n_outputs=1):
    """state: (B, input_dims) f32; returns (B, n_outputs) f32."""
    assert n_outputs == 1, "fused critic kernel assumes n_outputs == 1"
    B, in_dims = state.shape
    F = w_slab.shape[-1]

    # Batch tiling: rows multiple of 8 (sublane), tile up to 512 rows to
    # amortize per-grid-step overhead. When more than one tile is needed,
    # round the grid length up to an even number so the "parallel" batch axis
    # can land on both TensorCores on v7x (harmless on v5e/v6e).
    TB = min(512, _round_up(B, 8))
    num_tiles = pl.cdiv(B, TB)
    if num_tiles > 1:
        num_tiles = _round_up(num_tiles, 2)
        TB = _round_up(pl.cdiv(B, num_tiles), 8)
    B_pad = num_tiles * TB
    grid = (num_tiles,)

    # Fused pad + bf16 cast of the state in the wrapper (half the bytes of the
    # previous f32 padded materialization).
    x = jnp.zeros((B_pad, F), jnp.bfloat16)
    x = x.at[:B, :in_dims].set(state.astype(jnp.bfloat16))

    cost = pl.CostEstimate(
        flops=2 * B_pad * (3 * F * F + F),
        transcendentals=0,
        bytes_accessed=(2 * B_pad * F          # bf16 state
                        + 2 * w_slab.size      # bf16 weight slab
                        + 4 * vec_slab.size    # f32 bias slab
                        + 4 * B_pad * 128),    # f32 output
    )

    out = pl.pallas_call(
        _critic_kernel,
        out_shape=jax.ShapeDtypeStruct((B_pad, 128), jnp.float32),
        grid_spec=pltpu.PrefetchScalarGridSpec(
            num_scalar_prefetch=0,
            grid=grid,
            in_specs=[
                # state tile: streamed per grid step (default double-buffered)
                pl.BlockSpec((TB, F), lambda i: (i, 0)),
                # resident weight slab: fetched once, single-buffered
                pl.BlockSpec((3, F, F), lambda i: (0, 0, 0),
                             pipeline_mode=pl.Buffered(1)),
                # resident bias / value-head slab: fetched once, single-buffered
                pl.BlockSpec((8, F), lambda i: (0, 0),
                             pipeline_mode=pl.Buffered(1)),
            ],
            out_specs=pl.BlockSpec((TB, 128), lambda i: (i, 0)),
        ),
        compiler_params=pltpu.CompilerParams(
            dimension_semantics=("parallel",),   # v7x: shard batch tiles over 2 TCs
        ),
        cost_estimate=cost,
    )(x, w_slab, vec_slab)

    return out[:B, :n_outputs]


def init_critic_params(key, input_dims, fc1_dims, fc2_dims, fc3_dims, n_outputs):
    """Deterministic init mimicking PyTorch nn.Linear default (U[-1/sqrt(fan_in), +])."""
    dims = [(input_dims, fc1_dims), (fc1_dims, fc2_dims),
            (fc2_dims, fc3_dims), (fc3_dims, n_outputs)]
    names = ["1", "2", "3", "v"]
    params = {}
    for (fan_in, fan_out), name in zip(dims, names):
        key, kw, kb = jax.random.split(key, 3)
        bound = 1.0 / (fan_in ** 0.5)
        params[f"w{name}"] = jax.random.uniform(
            kw, (fan_in, fan_out), jnp.float32, -bound, bound)
        params[f"b{name}"] = jax.random.uniform(
            kb, (1, fan_out), jnp.float32, -bound, bound)
    return params


def _reference_forward(state, params):
    """Plain-JAX reference matching the kernel's bf16-operand / f32-accum matmuls.

    TODO(synk): the PyTorch module runs pure f32 matmuls; bf16 MXU operands
    deviate slightly — validate against a true f32 reference if critic values
    feed training targets.
    """
    def hidden(x, w, b):
        y = jnp.dot(x.astype(jnp.bfloat16), w.astype(jnp.bfloat16),
                    preferred_element_type=jnp.float32)
        return jnp.maximum(y + b, 0.0)

    x = hidden(state, params["w1"], params["b1"])
    x = hidden(x, params["w2"], params["b2"])
    x = hidden(x, params["w3"], params["b3"])
    return (jnp.sum(x * params["wv"][:, 0][None, :], axis=-1, keepdims=True)
            + params["bv"])


if __name__ == "__main__":
    # Shapes consistent with the module's constructor:
    # CriticNetwork(beta, input_dims=16, fc1_dims=32, fc2_dims=32, fc3_dims=32, n_outputs=1, ...)
    batch = 8
    input_dims, fc1_dims, fc2_dims, fc3_dims, n_outputs = 16, 32, 32, 32, 1

    key = jax.random.PRNGKey(0)
    key, pkey, skey = jax.random.split(key, 3)

    params = init_critic_params(pkey, input_dims, fc1_dims, fc2_dims, fc3_dims, n_outputs)
    state = jax.random.normal(skey, (batch, input_dims), jnp.float32)

    w_slab, vec_slab = pack_critic_params(params)

    value = critic_forward(state, w_slab, vec_slab, n_outputs=n_outputs)
    value = jax.block_until_ready(value)

    ref = _reference_forward(state, params)
    assert value.shape == (batch, n_outputs), value.shape
    # bf16 MXU operands (f32 accumulation) on both sides -> tight-but-not-exact match.
    assert jnp.allclose(value, ref, atol=2e-3, rtol=2e-3), \
        f"Pallas kernel mismatch vs reference, max abs err={float(jnp.max(jnp.abs(value - ref)))}"

    print("KERNEL_OK")
</pallas_src>

<mosaic_0001>
module attributes {stable_mosaic.version = 11 : i64} {
  func.func @_critic_kernel(%arg0: i32, %arg1: memref<8x128xbf16, #tpu.memory_space<vmem>>, %arg2: memref<3x128x128xbf16, #tpu.memory_space<vmem>>, %arg3: memref<8x128xf32, #tpu.memory_space<vmem>>, %arg4: memref<8x128xf32, #tpu.memory_space<vmem>>) attributes {dimension_semantics = [#tpu.dimension_semantics<parallel>], iteration_bounds = array<i64: 1>, scalar_prefetch = 0 : i64, scratch_operands = 0 : i64, tpu.core_type = #tpu.core_type<tc>, window_params = [{transform_indices = @transform_0, window_bounds = array<i64: 8, 128>}, {pipeline_mode = #tpu.pipeline_mode<synchronous>, transform_indices = @transform_1, window_bounds = array<i64: 3, 128, 128>}, {pipeline_mode = #tpu.pipeline_mode<synchronous>, transform_indices = @transform_2, window_bounds = array<i64: 8, 128>}, {transform_indices = @transform_3, window_bounds = array<i64: 8, 128>}]} {
    %c0 = arith.constant 0 : index
    %c0_0 = arith.constant 0 : index
    %0 = vector.load %arg1[%c0, %c0_0] : memref<8x128xbf16, #tpu.memory_space<vmem>>, vector<8x128xbf16>
    %c0_1 = arith.constant 0 : index
    %c0_2 = arith.constant 0 : index
    %c0_3 = arith.constant 0 : index
    %1 = vector.load %arg2[%c0_1, %c0_2, %c0_3] : memref<3x128x128xbf16, #tpu.memory_space<vmem>>, vector<1x128x128xbf16>
    %2 = vector.shape_cast %1 : vector<1x128x128xbf16> to vector<128x128xbf16>
    %cst = arith.constant dense<0.000000e+00> : vector<8x128xf32>
    %3 = tpu.matmul %0, %2, %cst {dimension_numbers = #tpu.dot_dimension_numbers<[1], [0], [0], [1], [0, 0, 1, 1], [], []>} : vector<8x128xbf16>, vector<128x128xbf16>, vector<8x128xf32> -> vector<8x128xf32>
    %c0_4 = arith.constant 0 : index
    %c0_5 = arith.constant 0 : index
    %4 = vector.load %arg3[%c0_4, %c0_5] : memref<8x128xf32, #tpu.memory_space<vmem>>, vector<1x128xf32>
    %5 = vector.broadcast %4 : vector<1x128xf32> to vector<8x128xf32>
    %6 = arith.addf %3, %5 : vector<8x128xf32>
    %cst_6 = arith.constant 0.000000e+00 : f32
    %7 = vector.broadcast %cst_6 : f32 to vector<8x128xf32>
    %8 = arith.maximumf %6, %7 : vector<8x128xf32>
    %9 = arith.truncf %8 : vector<8x128xf32> to vector<8x128xbf16>
    %c1 = arith.constant 1 : index
    %c0_7 = arith.constant 0 : index
    %c0_8 = arith.constant 0 : index
    %10 = vector.load %arg2[%c1, %c0_7, %c0_8] : memref<3x128x128xbf16, #tpu.memory_space<vmem>>, vector<1x128x128xbf16>
    %11 = vector.shape_cast %10 : vector<1x128x128xbf16> to vector<128x128xbf16>
    %cst_9 = arith.constant dense<0.000000e+00> : vector<8x128xf32>
    %12 = tpu.matmul %9, %11, %cst_9 {dimension_numbers = #tpu.dot_dimension_numbers<[1], [0], [0], [1], [0, 0, 1, 1], [], []>} : vector<8x128xbf16>, vector<128x128xbf16>, vector<8x128xf32> -> vector<8x128xf32>
    %c1_10 = arith.constant 1 : index
    %c0_11 = arith.constant 0 : index
    %13 = vector.load %arg3[%c1_10, %c0_11] : memref<8x128xf32, #tpu.memory_space<vmem>>, vector<1x128xf32>
    %14 = vector.broadcast %13 : vector<1x128xf32> to vector<8x128xf32>
    %15 = arith.addf %12, %14 : vector<8x128xf32>
    %cst_12 = arith.constant 0.000000e+00 : f32
    %16 = vector.broadcast %cst_12 : f32 to vector<8x128xf32>
    %17 = arith.maximumf %15, %16 : vector<8x128xf32>
    %18 = arith.truncf %17 : vector<8x128xf32> to vector<8x128xbf16>
    %c2 = arith.constant 2 : index
    %c0_13 = arith.constant 0 : index
    %c0_14 = arith.constant 0 : index
    %19 = vector.load %arg2[%c2, %c0_13, %c0_14] : memref<3x128x128xbf16, #tpu.memory_space<vmem>>, vector<1x128x128xbf16>
    %20 = vector.shape_cast %19 : vector<1x128x128xbf16> to vector<128x128xbf16>
    %cst_15 = arith.constant dense<0.000000e+00> : vector<8x128xf32>
    %21 = tpu.matmul %18, %20, %cst_15 {dimension_numbers = #tpu.dot_dimension_numbers<[1], [0], [0], [1], [0, 0, 1, 1], [], []>} : vector<8x128xbf16>, vector<128x128xbf16>, vector<8x128xf32> -> vector<8x128xf32>
    %c2_16 = arith.constant 2 : index
    %c0_17 = arith.constant 0 : index
    %22 = vector.load %arg3[%c2_16, %c0_17] : memref<8x128xf32, #tpu.memory_space<vmem>>, vector<1x128xf32>
    %23 = vector.broadcast %22 : vector<1x128xf32> to vector<8x128xf32>
    %24 = arith.addf %21, %23 : vector<8x128xf32>
    %cst_18 = arith.constant 0.000000e+00 : f32
    %25 = vector.broadcast %cst_18 : f32 to vector<8x128xf32>
    %26 = arith.maximumf %24, %25 : vector<8x128xf32>
    %c3 = arith.constant 3 : index
    %c0_19 = arith.constant 0 : index
    %27 = vector.load %arg3[%c3, %c0_19] : memref<8x128xf32, #tpu.memory_space<vmem>>, vector<1x128xf32>
    %c4 = arith.constant 4 : index
    %c0_20 = arith.constant 0 : index
    %28 = vector.load %arg3[%c4, %c0_20] : memref<8x128xf32, #tpu.memory_space<vmem>>, vector<1x128xf32>
    %29 = vector.broadcast %27 : vector<1x128xf32> to vector<8x128xf32>
    %30 = arith.mulf %26, %29 : vector<8x128xf32>
    %cst_21 = arith.constant dense<0.000000e+00> : vector<8xf32>
    %31 = vector.multi_reduction <add>, %30, %cst_21 [1] : vector<8x128xf32> to vector<8xf32>
    %32 = vector.shape_cast %31 : vector<8xf32> to vector<8x1xf32>
    %33 = vector.broadcast %32 : vector<8x1xf32> to vector<8x128xf32>
    %34 = vector.broadcast %28 : vector<1x128xf32> to vector<8x128xf32>
    %35 = arith.addf %33, %34 : vector<8x128xf32>
    %c0_22 = arith.constant 0 : index
    %c0_23 = arith.constant 0 : index
    %36 = vector.load %arg4[%c0_22, %c0_23] : memref<8x128xf32, #tpu.memory_space<vmem>>, vector<8x128xf32>
    tpu.vector_store %arg4[%c0_22, %c0_23], %35 {strides = array<i32>} : memref<8x128xf32, #tpu.memory_space<vmem>>, vector<8x128xf32>,
    return
  }
  func.func @transform_0(%arg0: i32) -> (i32, i32) {
    %c0_i32 = arith.constant 0 : i32
    %c0_i32_0 = arith.constant 0 : i32
    return %arg0, %c0_i32 : i32, i32
  }
  func.func @transform_1(%arg0: i32) -> (i32, i32, i32) {
    %c0_i32 = arith.constant 0 : i32
    %c0_i32_0 = arith.constant 0 : i32
    %c0_i32_1 = arith.constant 0 : i32
    %c0_i32_2 = arith.constant 0 : i32
    return %c0_i32, %c0_i32_0, %c0_i32_1 : i32, i32, i32
  }
  func.func @transform_2(%arg0: i32) -> (i32, i32) {
    %c0_i32 = arith.constant 0 : i32
    %c0_i32_0 = arith.constant 0 : i32
    %c0_i32_1 = arith.constant 0 : i32
    return %c0_i32, %c0_i32_0 : i32, i32
  }
  func.func @transform_3(%arg0: i32) -> (i32, i32) {
    %c0_i32 = arith.constant 0 : i32
    %c0_i32_0 = arith.constant 0 : i32
    return %arg0, %c0_i32 : i32, i32
  }
}

</mosaic_0001>

<llo_original>
// kernel: critic_forward.1
$region0: #{critic_forward.1}
  #allocation0 [shape = 'u32[]', space=smem, size = 0x4, offset = 0x4, fixed_abs, tag = 'smem constant byte address 0x4 - core index']
  #allocation1 [shape = 'u32[144,128]{1,0:T(1,128)}', space=vmem, size = 0x12000, scoped, tag = 'internal scratch']
  %s0 = inlined_call_operand.vmem [shape: bf16[8,128], index: 0, kind: input, shape index: {}]
  %s1 = inlined_call_operand.hbm [shape: bf16[3,128,128], index: 1, kind: input, shape index: {}]
  %s2 = inlined_call_operand.vmem [shape: f32[8,128], index: 2, kind: input, shape index: {}]
  %s3 = inlined_call_operand.vmem [shape: f32[8,128], index: 3, kind: output, shape index: {}]
  %s4 = sld [smem:[#allocation0]]
  $region26: #{critic_forward.1} parent=0
    _
  %s6 = ssub.s32 1, %s4
  %s7 = scalar_select 0, %s6, %s4
  $region1: #{critic_forward.1} parent=0
    #allocation2 [shape = 'u8[98304]{0}', space=vmem, size = 0x18000, scoped, tag = 'input window, operand 1, single buffered']
    #allocation3 [shape = 's32[1]{0}', space=sflag, size = 0x4, scoped, tag = 'scoped memory for critic_forward.1']
    %8 = vsyncpa [#allocation3], 0
    // Predicated region
    $region2: #{critic_forward.1} parent=1 // pred_check
      _
    $region3: #{critic_forward.1} parent=1 // pred_check_branch
      %10 = sbr.rel (0) target = $region5
    $region4: #{critic_forward.1} parent=1 // pred_region
      _
    $region5: #{critic_forward.1} parent=1 // pred_fallthru
      _
    // Predicated region
    $region6: #{critic_forward.1} parent=1 // pred_check
      _
    $region7: #{critic_forward.1} parent=1 // pred_check_branch
      %12 = sbr.rel (0) target = $region9
    $region8: #{critic_forward.1} parent=1 // pred_region
      %s14 = ssub.s32 3072, 3072
      %15 = vsyncadd [#allocation3], %s14
      %s16 = sshll.u32 [#allocation2], 4
      %s17 = int_to_ptr.vmem [resolvable:$true] %s16
      %22 = dma.hbm_to_vmem [thread:$0]  %s1, 3072, %s17, [#allocation3], 64, 64, 4
    $region9: #{critic_forward.1} parent=1 // pred_fallthru
      _
    // Predicated region
    $region10: #{critic_forward.1} parent=1 // pred_check
      _
    $region11: #{critic_forward.1} parent=1 // pred_check_branch
      %24 = sbr.rel (0) target = $region13
    $region12: #{critic_forward.1} parent=1 // pred_region
      _
    $region13: #{critic_forward.1} parent=1 // pred_fallthru
      _
    // Predicated region
    $region14: #{critic_forward.1} parent=1 // pred_check
      _
    $region15: #{critic_forward.1} parent=1 // pred_check_branch
      %26 = sbr.rel (0) target = $region17
    $region16: #{critic_forward.1} parent=1 // pred_region
      %27 = dma.done [#allocation3], 3072
    $region17: #{critic_forward.1} parent=1 // pred_fallthru
      _
    %v29 = vld [vmem:[%s0] sm:$0xf]
    %v30 = vld [vmem:[#allocation2] sm:$0xf]
    %v31 = vld [vmem:[#allocation2 + $0x4] sm:$0xf]
    %v32 = vld [vmem:[#allocation2 + $0x8] sm:$0xf]
    %v33 = vld [vmem:[#allocation2 + $0xc] sm:$0xf]
    %v34 = vld [vmem:[#allocation2 + $0x10] sm:$0xf]
    %v35 = vld [vmem:[#allocation2 + $0x14] sm:$0xf]
    %v36 = vld [vmem:[#allocation2 + $0x18] sm:$0xf]
    %v37 = vld [vmem:[#allocation2 + $0x1c] sm:$0xf]
    %v38 = vld [vmem:[#allocation2 + $0x20] sm:$0xf]
    %v39 = vld [vmem:[#allocation2 + $0x24] sm:$0xf]
    %v40 = vld [vmem:[#allocation2 + $0x28] sm:$0xf]
    %v41 = vld [vmem:[#allocation2 + $0x2c] sm:$0xf]
    %v42 = vld [vmem:[#allocation2 + $0x30] sm:$0xf]
    %v43 = vld [vmem:[#allocation2 + $0x34] sm:$0xf]
    %v44 = vld [vmem:[#allocation2 + $0x38] sm:$0xf]
    %v45 = vld [vmem:[#allocation2 + $0x3c] sm:$0xf]
    %v46 = vld [vmem:[%s2] sm:$0x1]
    %v47 = vlaneseq
    %v48 = vshrl.u32 %v47, 7
    %v49 = vsub.s32 0, %v48
    %v50 = vrot.slane %v46, %v49
    %v67 = vunpack.c.l.b16 %v30
    %v68 = vunpack.c.l.b16 %v31
    %v69 = vunpack.c.l.b16 %v32
    %v70 = vunpack.c.l.b16 %v33
    %v71 = vunpack.c.l.b16 %v34
    %v72 = vunpack.c.l.b16 %v35
    %v73 = vunpack.c.l.b16 %v36
    %v74 = vunpack.c.l.b16 %v37
    %v75 = vunpack.c.l.b16 %v38
    %v76 = vunpack.c.l.b16 %v39
    %v77 = vunpack.c.l.b16 %v40
    %v78 = vunpack.c.l.b16 %v41
    %v79 = vunpack.c.l.b16 %v42
    %v80 = vunpack.c.l.b16 %v43
    %v81 = vunpack.c.l.b16 %v44
    %v82 = vunpack.c.l.b16 %v45
    %v83 = vpack.c.b16 %v68, %v67
    %v84 = vpack.c.b16 %v70, %v69
    %v85 = vpack.c.b16 %v72, %v71
    %v86 = vpack.c.b16 %v74, %v73
    %v87 = vpack.c.b16 %v76, %v75
    %v88 = vpack.c.b16 %v78, %v77
    %v89 = vpack.c.b16 %v80, %v79
    %v90 = vpack.c.b16 %v82, %v81
    %99 = vmatprep.subr.bf16.mxu0 0
    %100 = vmatpush1.bf16.msra.mxu0 %v90
    %101 = vmatprep.subr.bf16.mxu0 0
    %102 = vmatpush1.bf16.msra.mxu0 %v89
    %103 = vmatprep.subr.bf16.mxu0 0
    %104 = vmatpush1.bf16.msra.mxu0 %v88
    %105 = vmatprep.subr.bf16.mxu0 0
    %106 = vmatpush1.bf16.msra.mxu0 %v87
    %107 = vmatprep.subr.bf16.mxu0 0
    %108 = vmatpush1.bf16.msra.mxu0 %v86
    %109 = vmatprep.subr.bf16.mxu0 0
    %110 = vmatpush1.bf16.msra.mxu0 %v85
    %111 = vmatprep.subr.bf16.mxu0 0
    %112 = vmatpush1.bf16.msra.mxu0 %v84
    %113 = vmatprep.subr.bf16.mxu0 0
    %114 = vmatpush1.bf16.msra.mxu0 %v83
    %115 = vmatprep.subr.bf16.mxu0 0
    %116 = vmatpush2.bf16.msra.mxu0 0
    %117 = vmatprep.subr.bf16.mxu0 0
    %118 = vmatpush2.bf16.msra.mxu0 0
    %119 = vmatprep.subr.bf16.mxu0 0
    %120 = vmatpush2.bf16.msra.mxu0 0
    %121 = vmatprep.subr.bf16.mxu0 0
    %122 = vmatpush2.bf16.msra.mxu0 0
    %123 = vmatprep.subr.bf16.mxu0 0
    %124 = vmatpush2.bf16.msra.mxu0 0
    %125 = vmatprep.subr.bf16.mxu0 0
    %126 = vmatpush2.bf16.msra.mxu0 0
    %127 = vmatprep.subr.bf16.mxu0 0
    %128 = vmatpush2.bf16.msra.mxu0 0
    %129 = vmatprep.subr.bf16.mxu0 0
    %130 = vmatpush2.bf16.msra.mxu0 0
    %131 = vmatprep.mubr.bf16.mxu0 0
    %132 = vmatmul.mubr.bf16.gmra.mxu0 %v29
    %v133 = vpop.f32.mrf.mxu0
    %v134 = vadd.f32 %v50, %v133
    %v135 = vpop.f32.mrf.mxu0
    %v136 = vpop.f32.mrf.mxu0
    %v137 = vpop.f32.mrf.mxu0
    %138 = vdwg.mxu0
    %v139 = vmax.f32 %v134, 0.0
    %v140 = vpack.c.bf16 %v139, %v139
    %s141 = scalar_lea.vmem [#allocation2], 64
    %v142 = vld [vmem:[%s141] sm:$0xf]
    %v143 = vld [vmem:[%s141 + $0x4] sm:$0xf]
    %v144 = vld [vmem:[%s141 + $0x8] sm:$0xf]
    %v145 = vld [vmem:[%s141 + $0xc] sm:$0xf]
    %v146 = vld [vmem:[%s141 + $0x10] sm:$0xf]
    %v147 = vld [vmem:[%s141 + $0x14] sm:$0xf]
    %v148 = vld [vmem:[%s141 + $0x18] sm:$0xf]
    %v149 = vld [vmem:[%s141 + $0x1c] sm:$0xf]
    %v150 = vld [vmem:[%s141 + $0x20] sm:$0xf]
    %v151 = vld [vmem:[%s141 + $0x24] sm:$0xf]
    %v152 = vld [vmem:[%s141 + $0x28] sm:$0xf]
    %v153 = vld [vmem:[%s141 + $0x2c] sm:$0xf]
    %v154 = vld [vmem:[%s141 + $0x30] sm:$0xf]
    %v155 = vld [vmem:[%s141 + $0x34] sm:$0xf]
    %v156 = vld [vmem:[%s141 + $0x38] sm:$0xf]
    %v157 = vld [vmem:[%s141 + $0x3c] sm:$0xf]
    %v158 = vld [vmem:[%s2 + $0x1] sm:$0x1]
    %v159 = vlaneseq
    %v160 = vshrl.u32 %v159, 7
    %v161 = vsub.s32 0, %v160
    %v162 = vrot.slane %v158, %v161
    %v179 = vunpack.c.l.b16 %v142
    %v180 = vunpack.c.l.b16 %v143
    %v181 = vunpack.c.l.b16 %v144
    %v182 = vunpack.c.l.b16 %v145
    %v183 = vunpack.c.l.b16 %v146
    %v184 = vunpack.c.l.b16 %v147
    %v185 = vunpack.c.l.b16 %v148
    %v186 = vunpack.c.l.b16 %v149
    %v187 = vunpack.c.l.b16 %v150
    %v188 = vunpack.c.l.b16 %v151
    %v189 = vunpack.c.l.b16 %v152
    %v190 = vunpack.c.l.b16 %v153
    %v191 = vunpack.c.l.b16 %v154
    %v192 = vunpack.c.l.b16 %v155
    %v193 = vunpack.c.l.b16 %v156
    %v194 = vunpack.c.l.b16 %v157
    %v195 = vpack.c.b16 %v180, %v179
    %v196 = vpack.c.b16 %v182, %v181
    %v197 = vpack.c.b16 %v184, %v183
    %v198 = vpack.c.b16 %v186, %v185
    %v199 = vpack.c.b16 %v188, %v187
    %v200 = vpack.c.b16 %v190, %v189
    %v201 = vpack.c.b16 %v192, %v191
    %v202 = vpack.c.b16 %v194, %v193
    %211 = vmatprep.subr.bf16.mxu0 0
    %212 = vmatpush1.bf16.msra.mxu0 %v202
    %213 = vmatprep.subr.bf16.mxu0 0
    %214 = vmatpush1.bf16.msra.mxu0 %v201
    %215 = vmatprep.subr.bf16.mxu0 0
    %216 = vmatpush1.bf16.msra.mxu0 %v200
    %217 = vmatprep.subr.bf16.mxu0 0
    %218 = vmatpush1.bf16.msra.mxu0 %v199
    %219 = vmatprep.subr.bf16.mxu0 0
    %220 = vmatpush1.bf16.msra.mxu0 %v198
    %221 = vmatprep.subr.bf16.mxu0 0
    %222 = vmatpush1.bf16.msra.mxu0 %v197
    %223 = vmatprep.subr.bf16.mxu0 0
    %224 = vmatpush1.bf16.msra.mxu0 %v196
    %225 = vmatprep.subr.bf16.mxu0 0
    %226 = vmatpush1.bf16.msra.mxu0 %v195
    %227 = vmatprep.subr.bf16.mxu0 0
    %228 = vmatpush2.bf16.msra.mxu0 0
    %229 = vmatprep.subr.bf16.mxu0 0
    %230 = vmatpush2.bf16.msra.mxu0 0
    %231 = vmatprep.subr.bf16.mxu0 0
    %232 = vmatpush2.bf16.msra.mxu0 0
    %233 = vmatprep.subr.bf16.mxu0 0
    %234 = vmatpush2.bf16.msra.mxu0 0
    %235 = vmatprep.subr.bf16.mxu0 0
    %236 = vmatpush2.bf16.msra.mxu0 0
    %237 = vmatprep.subr.bf16.mxu0 0
    %238 = vmatpush2.bf16.msra.mxu0 0
    %239 = vmatprep.subr.bf16.mxu0 0
    %240 = vmatpush2.bf16.msra.mxu0 0
    %241 = vmatprep.subr.bf16.mxu0 0
    %242 = vmatpush2.bf16.msra.mxu0 0
    %243 = vmatprep.mubr.bf16.mxu0 0
    %244 = vmatmul.mubr.bf16.gmra.mxu0 %v140
    %v245 = vpop.f32.mrf.mxu0
    %v246 = vadd.f32 %v162, %v245
    %v247 = vpop.f32.mrf.mxu0
    %v248 = vpop.f32.mrf.mxu0
    %v249 = vpop.f32.mrf.mxu0
    %250 = vdwg.mxu0
    %v251 = vmax.f32 %v246, 0.0
    %v252 = vpack.c.bf16 %v251, %v251
    %s253 = scalar_lea.vmem [#allocation2], 128
    %v254 = vld [vmem:[%s253] sm:$0xf]
    %v255 = vld [vmem:[%s253 + $0x4] sm:$0xf]
    %v256 = vld [vmem:[%s253 + $0x8] sm:$0xf]
    %v257 = vld [vmem:[%s253 + $0xc] sm:$0xf]
    %v258 = vld [vmem:[%s253 + $0x10] sm:$0xf]
    %v259 = vld [vmem:[%s253 + $0x14] sm:$0xf]
    %v260 = vld [vmem:[%s253 + $0x18] sm:$0xf]
    %v261 = vld [vmem:[%s253 + $0x1c] sm:$0xf]
    %v262 = vld [vmem:[%s253 + $0x20] sm:$0xf]
    %v263 = vld [vmem:[%s253 + $0x24] sm:$0xf]
    %v264 = vld [vmem:[%s253 + $0x28] sm:$0xf]
    %v265 = vld [vmem:[%s253 + $0x2c] sm:$0xf]
    %v266 = vld [vmem:[%s253 + $0x30] sm:$0xf]
    %v267 = vld [vmem:[%s253 + $0x34] sm:$0xf]
    %v268 = vld [vmem:[%s253 + $0x38] sm:$0xf]
    %v269 = vld [vmem:[%s253 + $0x3c] sm:$0xf]
    %v270 = vld [vmem:[%s2 + $0x2] sm:$0x1]
    %v271 = vlaneseq
    %v272 = vshrl.u32 %v271, 7
    %v273 = vsub.s32 0, %v272
    %v274 = vrot.slane %v270, %v273
    %v291 = vunpack.c.l.b16 %v254
    %v292 = vunpack.c.l.b16 %v255
    %v293 = vunpack.c.l.b16 %v256
    %v294 = vunpack.c.l.b16 %v257
    %v295 = vunpack.c.l.b16 %v258
    %v296 = vunpack.c.l.b16 %v259
    %v297 = vunpack.c.l.b16 %v260
    %v298 = vunpack.c.l.b16 %v261
    %v299 = vunpack.c.l.b16 %v262
    %v300 = vunpack.c.l.b16 %v263
    %v301 = vunpack.c.l.b16 %v264
    %v302 = vunpack.c.l.b16 %v265
    %v303 = vunpack.c.l.b16 %v266
    %v304 = vunpack.c.l.b16 %v267
    %v305 = vunpack.c.l.b16 %v268
    %v306 = vunpack.c.l.b16 %v269
    %v307 = vpack.c.b16 %v292, %v291
    %v308 = vpack.c.b16 %v294, %v293
    %v309 = vpack.c.b16 %v296, %v295
    %v310 = vpack.c.b16 %v298, %v297
    %v311 = vpack.c.b16 %v300, %v299
    %v312 = vpack.c.b16 %v302, %v301
    %v313 = vpack.c.b16 %v304, %v303
    %v314 = vpack.c.b16 %v306, %v305
    %323 = vmatprep.subr.bf16.mxu0 0
    %324 = vmatpush1.bf16.msra.mxu0 %v314
    %325 = vmatprep.subr.bf16.mxu0 0
    %326 = vmatpush1.bf16.msra.mxu0 %v313
    %327 = vmatprep.subr.bf16.mxu0 0
    %328 = vmatpush1.bf16.msra.mxu0 %v312
    %329 = vmatprep.subr.bf16.mxu0 0
    %330 = vmatpush1.bf16.msra.mxu0 %v311
    %331 = vmatprep.subr.bf16.mxu0 0
    %332 = vmatpush1.bf16.msra.mxu0 %v310
    %333 = vmatprep.subr.bf16.mxu0 0
    %334 = vmatpush1.bf16.msra.mxu0 %v309
    %335 = vmatprep.subr.bf16.mxu0 0
    %336 = vmatpush1.bf16.msra.mxu0 %v308
    %337 = vmatprep.subr.bf16.mxu0 0
    %338 = vmatpush1.bf16.msra.mxu0 %v307
    %339 = vmatprep.subr.bf16.mxu0 0
    %340 = vmatpush2.bf16.msra.mxu0 0
    %341 = vmatprep.subr.bf16.mxu0 0
    %342 = vmatpush2.bf16.msra.mxu0 0
    %343 = vmatprep.subr.bf16.mxu0 0
    %344 = vmatpush2.bf16.msra.mxu0 0
    %345 = vmatprep.subr.bf16.mxu0 0
    %346 = vmatpush2.bf16.msra.mxu0 0
    %347 = vmatprep.subr.bf16.mxu0 0
    %348 = vmatpush2.bf16.msra.mxu0 0
    %349 = vmatprep.subr.bf16.mxu0 0
    %350 = vmatpush2.bf16.msra.mxu0 0
    %351 = vmatprep.subr.bf16.mxu0 0
    %352 = vmatpush2.bf16.msra.mxu0 0
    %353 = vmatprep.subr.bf16.mxu0 0
    %354 = vmatpush2.bf16.msra.mxu0 0
    %355 = vmatprep.mubr.bf16.mxu0 0
    %356 = vmatmul.mubr.bf16.gmra.mxu0 %v252
    %v357 = vpop.f32.mrf.mxu0
    %v358 = vadd.f32 %v274, %v357
    %v359 = vpop.f32.mrf.mxu0
    %v360 = vpop.f32.mrf.mxu0
    %v361 = vpop.f32.mrf.mxu0
    %362 = vdwg.mxu0
    %v363 = vmax.f32 %v358, 0.0
    %v364 = vld [vmem:[%s2 + $0x3] sm:$0x1]
    %v365 = vld [vmem:[%s2 + $0x4] sm:$0x1]
    %v366 = vlaneseq
    %v367 = vshrl.u32 %v366, 7
    %v368 = vsub.s32 0, %v367
    %v369 = vrot.slane %v364, %v368
    %v370 = vmul.f32 %v363, %v369
    %371 = vadd.xlane.f32.xlu0 %v370
    %v372 = vpop.xlane.xlu0 %371
    %v373 = vlaneseq
    %v374 = vshrl.u32 %v373, 7
    %v375 = vsub.s32 0, %v374
    %v376 = vrot.slane %v365, %v375
    %v377 = vadd.f32 %v372, %v376
    %378 = vst [vmem:[%s3] sm:$0xff] %v377
    // Predicated region
    $region18: #{critic_forward.1} parent=1 // pred_check
      _
    $region19: #{critic_forward.1} parent=1 // pred_check_branch
      %380 = sbr.rel (0) target = $region21
    $region20: #{critic_forward.1} parent=1 // pred_region
      _
    $region21: #{critic_forward.1} parent=1 // pred_fallthru
      _
    // Predicated region
    $region22: #{critic_forward.1} parent=1 // pred_check
      _
    $region23: #{critic_forward.1} parent=1 // pred_check_branch
      %382 = sbr.rel (0) target = $region25
    $region24: #{critic_forward.1} parent=1 // pred_region
      _
    $region25: #{critic_forward.1} parent=1 // pred_fallthru
      _
    %383 = vsyncpa [#allocation3], 1

</llo_original>
